<compile_context>
chip_gen: v6e
topology: v6e:2x2x1
jax: 0.10.0
libtpu: 0.0.40
codegen_flags: <defaults>
</compile_context>

<pallas_src>
import jax
import jax.numpy as jnp
from jax import lax
from jax.experimental import pallas as pl
from jax.experimental.pallas import tpu as pltpu


def _readout_kernel(x_ref, pool_ref, wc_ref, bc_ref, o_ref):
    # x_ref:    [b_tile*Ncap, Lt] int32 token-id block (cast to f32 in-kernel)
    # pool_ref: [b_tile, b_tile*Ncap] f32 block-diagonal 1/Ncap pooling matrix (resident)
    # wc_ref:   [Lt, Nv] f32 fused weight  (w_fe @ w_ro.T), resident
    # bc_ref:   [1, Nv]  f32 fused bias    (b_fe @ w_ro.T + b_ro), resident
    # o_ref:    [b_tile, Nv] f32 output block
    x = x_ref[...].astype(jnp.float32)

    # Caption mean as an MXU matmul (avoids reshape relayout + XLU reduce).
    pooled = jnp.dot(pool_ref[...], x, preferred_element_type=jnp.float32)   # [b_tile, Lt]

    # Fused (feature-extractor ∘ readout) projection, lane-dense N = Nv.
    out = jnp.dot(pooled, wc_ref[...], preferred_element_type=jnp.float32)   # [b_tile, Nv]
    o_ref[...] = out + bc_ref[...]


def _round_up(n, m):
    return (n + m - 1) // m * m


def encoder_text_readout(x_tokens, w_fe, b_fe, w_ro, b_ro, *, b_tile_cap=128):
    """
    x_tokens: [B, Ncap, Lt] int32 token ids
    w_fe:     [Lt, Nt] float32   (synthetic linear feature extractor)
    b_fe:     [Nt]     float32
    w_ro:     [Nv, Nt] float32   (PyTorch Linear weight layout)
    b_ro:     [Nv]     float32
    returns:  [B, Nv]  float32
    """
    B, Ncap, Lt = x_tokens.shape
    Nv = w_ro.shape[0]
    f32 = jnp.float32

    # --- one-time weight prep (would be cached per model in a real setting) ---
    w_ro32 = w_ro.astype(f32)
    # Contract on last dims -> no explicit transpose op is emitted.
    w_comb = lax.dot_general(w_fe.astype(f32), w_ro32,
                             (((1,), (1,)), ((), ())))                       # [Lt, Nv]
    b_comb = lax.dot_general(b_fe.astype(f32)[None, :], w_ro32,
                             (((1,), (1,)), ((), ()))) + b_ro.astype(f32)[None, :]  # [1, Nv]

    # --- row tiling over the batch axis (multiple of 8 sublanes) ---
    b_tile = min(_round_up(B, 8), b_tile_cap)
    B_pad = _round_up(B, b_tile)
    rows = b_tile * Ncap                       # BN rows per grid step

    x2d = x_tokens.reshape(B * Ncap, Lt)       # int32; cast happens in-kernel
    if B_pad != B:
        x2d = jnp.pad(x2d, ((0, (B_pad - B) * Ncap), (0, 0)))

    # Block-diagonal caption-mean matrix: pool[i, j] = 1/Ncap iff j // Ncap == i.
    pool = (jnp.arange(b_tile, dtype=jnp.int32)[:, None]
            == (jnp.arange(rows, dtype=jnp.int32)[None, :] // Ncap)
            ).astype(f32) * (1.0 / Ncap)                                     # [b_tile, rows]

    grid = (B_pad // b_tile,)
    grid_spec = pl.GridSpec(
        grid=grid,
        in_specs=[
            pl.BlockSpec((rows, Lt), lambda i: (i, 0)),       # x block (pipelined)
            pl.BlockSpec((b_tile, rows), lambda i: (0, 0)),   # pooling matrix (resident)
            pl.BlockSpec((Lt, Nv), lambda i: (0, 0)),         # fused weight (resident)
            pl.BlockSpec((1, Nv), lambda i: (0, 0)),          # fused bias (resident)
        ],
        out_specs=pl.BlockSpec((b_tile, Nv), lambda i: (i, 0)),
    )

    flops = 2 * B_pad * Ncap * b_tile * Lt + 2 * B_pad * Lt * Nv
    bytes_accessed = (x2d.size * 4 + pool.size * 4
                      + w_comb.size * 4 + b_comb.size * 4 + B_pad * Nv * 4)

    out = pl.pallas_call(
        _readout_kernel,
        out_shape=jax.ShapeDtypeStruct((B_pad, Nv), f32),
        grid_spec=grid_spec,
        compiler_params=pltpu.CompilerParams(
            dimension_semantics=("parallel",)),
        cost_estimate=pl.CostEstimate(flops=flops, transcendentals=0,
                                      bytes_accessed=bytes_accessed),
    )(x2d, pool, w_comb, b_comb)

    return out[:B]


def _reference(x_tokens, w_fe, b_fe, w_ro, b_ro):
    B, Ncap, Lt = x_tokens.shape
    Nt = w_fe.shape[1]
    x2d = x_tokens.reshape(B * Ncap, Lt).astype(jnp.float32)
    feats = x2d @ w_fe + b_fe[None, :]
    pooled = feats.reshape(B, Ncap, Nt).mean(axis=1)
    return pooled @ w_ro.T + b_ro[None, :]


if __name__ == "__main__":
    # Small shapes consistent with the forward: B=2 images, 4 captions/image,
    # 16 tokens/caption, Nt=32 transformer features, Nv=128 voxels.
    B, Ncap, Lt, Nt, Nv = 2, 4, 16, 32, 128

    key = jax.random.PRNGKey(0)
    k_x, k_wfe, k_bfe, k_wro, k_bro = jax.random.split(key, 5)

    x_tokens = jax.random.randint(k_x, (B, Ncap, Lt), 0, 1000, dtype=jnp.int32)

    # Deterministic synthetic parameters (Linear-like scaling).
    w_fe = jax.random.normal(k_wfe, (Lt, Nt), jnp.float32) * (1.0 / Lt) ** 0.5
    b_fe = jax.random.normal(k_bfe, (Nt,), jnp.float32) * 0.01
    w_ro = jax.random.normal(k_wro, (Nv, Nt), jnp.float32) * (1.0 / Nt) ** 0.5
    b_ro = jax.random.normal(k_bro, (Nv,), jnp.float32) * 0.01

    out = encoder_text_readout(x_tokens, w_fe, b_fe, w_ro, b_ro)
    out = jax.block_until_ready(out)

    ref = _reference(x_tokens, w_fe, b_fe, w_ro, b_ro)
    assert out.shape == (B, Nv) and out.dtype == jnp.float32
    assert jnp.allclose(out, ref, atol=1e-2, rtol=1e-3), "mismatch vs reference"

    print("KERNEL_OK")
</pallas_src>

<mosaic_0001>
module attributes {stable_mosaic.version = 11 : i64} {
  func.func @_readout_kernel(%arg0: i32, %arg1: memref<32x16xi32, #tpu.memory_space<vmem>>, %arg2: memref<8x32xf32, #tpu.memory_space<vmem>>, %arg3: memref<16x128xf32, #tpu.memory_space<vmem>>, %arg4: memref<1x128xf32, #tpu.memory_space<vmem>>, %arg5: memref<8x128xf32, #tpu.memory_space<vmem>>) attributes {dimension_semantics = [#tpu.dimension_semantics<parallel>], iteration_bounds = array<i64: 1>, scalar_prefetch = 0 : i64, scratch_operands = 0 : i64, tpu.core_type = #tpu.core_type<tc>, window_params = [{transform_indices = @transform_0, window_bounds = array<i64: 32, 16>}, {pipeline_mode = #tpu.pipeline_mode<synchronous>, transform_indices = @transform_1, window_bounds = array<i64: 8, 32>}, {pipeline_mode = #tpu.pipeline_mode<synchronous>, transform_indices = @transform_2, window_bounds = array<i64: 16, 128>}, {pipeline_mode = #tpu.pipeline_mode<synchronous>, transform_indices = @transform_3, window_bounds = array<i64: 1, 128>}, {transform_indices = @transform_4, window_bounds = array<i64: 8, 128>}]} {
    %c0 = arith.constant 0 : index
    %c0_0 = arith.constant 0 : index
    %0 = vector.load %arg1[%c0, %c0_0] : memref<32x16xi32, #tpu.memory_space<vmem>>, vector<32x16xi32>
    %1 = arith.sitofp %0 : vector<32x16xi32> to vector<32x16xf32>
    %c0_1 = arith.constant 0 : index
    %c0_2 = arith.constant 0 : index
    %2 = vector.load %arg2[%c0_1, %c0_2] : memref<8x32xf32, #tpu.memory_space<vmem>>, vector<8x32xf32>
    %cst = arith.constant dense<0.000000e+00> : vector<8x16xf32>
    %3 = tpu.matmul %2, %1, %cst {dimension_numbers = #tpu.dot_dimension_numbers<[1], [0], [0], [1], [0, 0, 1, 1], [], []>} : vector<8x32xf32>, vector<32x16xf32>, vector<8x16xf32> -> vector<8x16xf32>
    %c0_3 = arith.constant 0 : index
    %c0_4 = arith.constant 0 : index
    %4 = vector.load %arg3[%c0_3, %c0_4] : memref<16x128xf32, #tpu.memory_space<vmem>>, vector<16x128xf32>
    %cst_5 = arith.constant dense<0.000000e+00> : vector<8x128xf32>
    %5 = tpu.matmul %3, %4, %cst_5 {dimension_numbers = #tpu.dot_dimension_numbers<[1], [0], [0], [1], [0, 0, 1, 1], [], []>} : vector<8x16xf32>, vector<16x128xf32>, vector<8x128xf32> -> vector<8x128xf32>
    %c0_6 = arith.constant 0 : index
    %c0_7 = arith.constant 0 : index
    %6 = vector.load %arg4[%c0_6, %c0_7] : memref<1x128xf32, #tpu.memory_space<vmem>>, vector<1x128xf32>
    %7 = vector.broadcast %6 : vector<1x128xf32> to vector<8x128xf32>
    %8 = arith.addf %5, %7 : vector<8x128xf32>
    %c0_8 = arith.constant 0 : index
    %c0_9 = arith.constant 0 : index
    %9 = vector.load %arg5[%c0_8, %c0_9] : memref<8x128xf32, #tpu.memory_space<vmem>>, vector<8x128xf32>
    tpu.vector_store %arg5[%c0_8, %c0_9], %8 {strides = array<i32>} : memref<8x128xf32, #tpu.memory_space<vmem>>, vector<8x128xf32>,
    return
  }
  func.func @transform_0(%arg0: i32) -> (i32, i32) {
    %c0_i32 = arith.constant 0 : i32
    %c0_i32_0 = arith.constant 0 : i32
    return %arg0, %c0_i32 : i32, i32
  }
  func.func @transform_1(%arg0: i32) -> (i32, i32) {
    %c0_i32 = arith.constant 0 : i32
    %c0_i32_0 = arith.constant 0 : i32
    %c0_i32_1 = arith.constant 0 : i32
    return %c0_i32, %c0_i32_0 : i32, i32
  }
  func.func @transform_2(%arg0: i32) -> (i32, i32) {
    %c0_i32 = arith.constant 0 : i32
    %c0_i32_0 = arith.constant 0 : i32
    %c0_i32_1 = arith.constant 0 : i32
    return %c0_i32, %c0_i32_0 : i32, i32
  }
  func.func @transform_3(%arg0: i32) -> (i32, i32) {
    %c0_i32 = arith.constant 0 : i32
    %c0_i32_0 = arith.constant 0 : i32
    %c0_i32_1 = arith.constant 0 : i32
    return %c0_i32, %c0_i32_0 : i32, i32
  }
  func.func @transform_4(%arg0: i32) -> (i32, i32) {
    %c0_i32 = arith.constant 0 : i32
    %c0_i32_0 = arith.constant 0 : i32
    return %arg0, %c0_i32 : i32, i32
  }
}

</mosaic_0001>

<llo_original>
// kernel: tpu_custom_call.1
$region0: #{tpu_custom_call.1}
  #allocation0 [shape = 'u32[]', space=smem, size = 0x4, offset = 0x4, fixed_abs, tag = 'smem constant byte address 0x4 - core index']
  #allocation1 [shape = 'u32[144,128]{1,0:T(1,128)}', space=vmem, size = 0x12000, scoped, tag = 'internal scratch']
  %s0 = inlined_call_operand.vmem [shape: s32[32,16], index: 0, kind: input, shape index: {}]
  %s1 = inlined_call_operand.vmem [shape: f32[8,32], index: 1, kind: input, shape index: {}]
  %s2 = inlined_call_operand.vmem [shape: f32[16,128], index: 2, kind: input, shape index: {}]
  %s3 = inlined_call_operand.vmem [shape: f32[1,128], index: 3, kind: input, shape index: {}]
  %s4 = inlined_call_operand.hbm [shape: f32[8,128], index: 4, kind: output, shape index: {}]
  %s5 = sld [smem:[#allocation0]]
  $region26: #{tpu_custom_call.1} parent=0
    _
  %s7 = ssub.s32 1, %s5
  %s8 = scalar_select 0, %s7, %s5
  $region1: #{tpu_custom_call.1} parent=0
    #allocation2 [shape = 'u8[4096]{0}', space=vmem, size = 0x1000, scoped, tag = 'output window, operand 0, single buffered']
    #allocation3 [shape = 's32[1]{0}', space=sflag, size = 0x4, scoped, tag = 'scoped memory for tpu_custom_call.1']
    %9 = vsyncpa [#allocation3], 0
    // Predicated region
    $region2: #{tpu_custom_call.1} parent=1 // pred_check
      _
    $region3: #{tpu_custom_call.1} parent=1 // pred_check_branch
      %11 = sbr.rel (0) target = $region5
    $region4: #{tpu_custom_call.1} parent=1 // pred_region
      _
    $region5: #{tpu_custom_call.1} parent=1 // pred_fallthru
      _
    // Predicated region
    $region6: #{tpu_custom_call.1} parent=1 // pred_check
      _
    $region7: #{tpu_custom_call.1} parent=1 // pred_check_branch
      %13 = sbr.rel (0) target = $region9
    $region8: #{tpu_custom_call.1} parent=1 // pred_region
      _
    $region9: #{tpu_custom_call.1} parent=1 // pred_fallthru
      _
    // Predicated region
    $region10: #{tpu_custom_call.1} parent=1 // pred_check
      _
    $region11: #{tpu_custom_call.1} parent=1 // pred_check_branch
      %15 = sbr.rel (0) target = $region13
    $region12: #{tpu_custom_call.1} parent=1 // pred_region
      _
    $region13: #{tpu_custom_call.1} parent=1 // pred_fallthru
      _
    // Predicated region
    $region14: #{tpu_custom_call.1} parent=1 // pred_check
      _
    $region15: #{tpu_custom_call.1} parent=1 // pred_check_branch
      %17 = sbr.rel (0) target = $region17
    $region16: #{tpu_custom_call.1} parent=1 // pred_region
      _
    $region17: #{tpu_custom_call.1} parent=1 // pred_fallthru
      _
    %v18 = vld [vmem:[%s0] sm:$0xff]
    %v19 = vld [vmem:[%s0 + $0x8] sm:$0xff]
    %v20 = vld [vmem:[%s0 + $0x10] sm:$0xff]
    %v21 = vld [vmem:[%s0 + $0x18] sm:$0xff]
    %v22 = vcvt.s32.f32 %v18
    %v23 = vcvt.s32.f32 %v19
    %v24 = vcvt.s32.f32 %v20
    %v25 = vcvt.s32.f32 %v21
    %v26 = vld [vmem:[%s1] sm:$0xff]
    %vm27 = vcmask 261120
    %v29 = vsel %vm27, %v26, 0
    %31 = vmatprep.subr.mxu0 0.0
    %32 = vmatpush1.msra.mxu0 0.0
    %33 = vmatprep.subr.mxu0 0.0
    %34 = vmatpush1.msra.mxu0 0.0
    %35 = vmatprep.subr.mxu0 0.0
    %36 = vmatpush1.msra.mxu0 0.0
    %37 = vmatprep.subr.mxu0 0.0
    %38 = vmatpush1.msra.mxu0 0.0
    %39 = vmatprep.subr.mxu0 0.0
    %40 = vmatpush1.msra.mxu0 0.0
    %41 = vmatprep.subr.mxu0 0.0
    %42 = vmatpush1.msra.mxu0 0.0
    %43 = vmatprep.subr.mxu0 0.0
    %44 = vmatpush1.msra.mxu0 0.0
    %45 = vmatprep.subr.mxu0 0.0
    %46 = vmatpush1.msra.mxu0 0.0
    %47 = vmatprep.subr.mxu0 0.0
    %48 = vmatpush1.msra.mxu0 0.0
    %49 = vmatprep.subr.mxu0 0.0
    %50 = vmatpush1.msra.mxu0 0.0
    %51 = vmatprep.subr.mxu0 0.0
    %52 = vmatpush1.msra.mxu0 0.0
    %53 = vmatprep.subr.mxu0 0.0
    %54 = vmatpush1.msra.mxu0 0.0
    %55 = vmatprep.subr.mxu0 0.0
    %56 = vmatpush1.msra.mxu0 %v25
    %57 = vmatprep.subr.mxu0 0.0
    %58 = vmatpush1.msra.mxu0 %v24
    %59 = vmatprep.subr.mxu0 0.0
    %60 = vmatpush1.msra.mxu0 %v23
    %61 = vmatprep.subr.mxu0 0.0
    %62 = vmatpush1.msra.mxu0 %v22
    %63 = vmatprep.subr.mxu0 0.0
    %64 = vmatpush2.msra.mxu0 0.0
    %65 = vmatprep.subr.mxu0 0.0
    %66 = vmatpush2.msra.mxu0 0.0
    %67 = vmatprep.subr.mxu0 0.0
    %68 = vmatpush2.msra.mxu0 0.0
    %69 = vmatprep.subr.mxu0 0.0
    %70 = vmatpush2.msra.mxu0 0.0
    %71 = vmatprep.subr.mxu0 0.0
    %72 = vmatpush2.msra.mxu0 0.0
    %73 = vmatprep.subr.mxu0 0.0
    %74 = vmatpush2.msra.mxu0 0.0
    %75 = vmatprep.subr.mxu0 0.0
    %76 = vmatpush2.msra.mxu0 0.0
    %77 = vmatprep.subr.mxu0 0.0
    %78 = vmatpush2.msra.mxu0 0.0
    %79 = vmatprep.subr.mxu0 0.0
    %80 = vmatpush2.msra.mxu0 0.0
    %81 = vmatprep.subr.mxu0 0.0
    %82 = vmatpush2.msra.mxu0 0.0
    %83 = vmatprep.subr.mxu0 0.0
    %84 = vmatpush2.msra.mxu0 0.0
    %85 = vmatprep.subr.mxu0 0.0
    %86 = vmatpush2.msra.mxu0 0.0
    %87 = vmatprep.subr.mxu0 0.0
    %88 = vmatpush2.msra.mxu0 0.0
    %89 = vmatprep.subr.mxu0 0.0
    %90 = vmatpush2.msra.mxu0 0.0
    %91 = vmatprep.subr.mxu0 0.0
    %92 = vmatpush2.msra.mxu0 0.0
    %93 = vmatprep.subr.mxu0 0.0
    %94 = vmatpush2.msra.mxu0 0.0
    %95 = vmatprep.mubr.f32.mxu0 0.0
    %96 = vmatmul.mubr.f32.gmra.mxu0 %v29
    %v97 = vpop.f32.mrf.mxu0
    %v98 = vadd.f32 0.0, %v97
    %v99 = vpop.f32.mrf.mxu0
    %100 = vdwg.mxu0
    %v101 = vld [vmem:[%s2] sm:$0xff]
    %v102 = vld [vmem:[%s2 + $0x8] sm:$0xff]
    %v103 = vld [vmem:[%s3] sm:$0x1]
    %v105 = vlaneseq
    %v106 = vshrl.u32 %v105, 7
    %v107 = vsub.s32 0, %v106
    %v108 = vrot.slane %v103, %v107
    %vm110 = vcmask 130048
    %v112 = vsel %vm110, %v98, 0
    %114 = vmatprep.subr.mxu0 0.0
    %115 = vmatpush1.msra.mxu0 0.0
    %116 = vmatprep.subr.mxu0 0.0
    %117 = vmatpush1.msra.mxu0 0.0
    %118 = vmatprep.subr.mxu0 0.0
    %119 = vmatpush1.msra.mxu0 0.0
    %120 = vmatprep.subr.mxu0 0.0
    %121 = vmatpush1.msra.mxu0 0.0
    %122 = vmatprep.subr.mxu0 0.0
    %123 = vmatpush1.msra.mxu0 0.0
    %124 = vmatprep.subr.mxu0 0.0
    %125 = vmatpush1.msra.mxu0 0.0
    %126 = vmatprep.subr.mxu0 0.0
    %127 = vmatpush1.msra.mxu0 0.0
    %128 = vmatprep.subr.mxu0 0.0
    %129 = vmatpush1.msra.mxu0 0.0
    %130 = vmatprep.subr.mxu0 0.0
    %131 = vmatpush1.msra.mxu0 0.0
    %132 = vmatprep.subr.mxu0 0.0
    %133 = vmatpush1.msra.mxu0 0.0
    %134 = vmatprep.subr.mxu0 0.0
    %135 = vmatpush1.msra.mxu0 0.0
    %136 = vmatprep.subr.mxu0 0.0
    %137 = vmatpush1.msra.mxu0 0.0
    %138 = vmatprep.subr.mxu0 0.0
    %139 = vmatpush1.msra.mxu0 0.0
    %140 = vmatprep.subr.mxu0 0.0
    %141 = vmatpush1.msra.mxu0 0.0
    %142 = vmatprep.subr.mxu0 0.0
    %143 = vmatpush1.msra.mxu0 %v102
    %144 = vmatprep.subr.mxu0 0.0
    %145 = vmatpush1.msra.mxu0 %v101
    %146 = vmatprep.subr.mxu0 0.0
    %147 = vmatpush2.msra.mxu0 0.0
    %148 = vmatprep.subr.mxu0 0.0
    %149 = vmatpush2.msra.mxu0 0.0
    %150 = vmatprep.subr.mxu0 0.0
    %151 = vmatpush2.msra.mxu0 0.0
    %152 = vmatprep.subr.mxu0 0.0
    %153 = vmatpush2.msra.mxu0 0.0
    %154 = vmatprep.subr.mxu0 0.0
    %155 = vmatpush2.msra.mxu0 0.0
    %156 = vmatprep.subr.mxu0 0.0
    %157 = vmatpush2.msra.mxu0 0.0
    %158 = vmatprep.subr.mxu0 0.0
    %159 = vmatpush2.msra.mxu0 0.0
    %160 = vmatprep.subr.mxu0 0.0
    %161 = vmatpush2.msra.mxu0 0.0
    %162 = vmatprep.subr.mxu0 0.0
    %163 = vmatpush2.msra.mxu0 0.0
    %164 = vmatprep.subr.mxu0 0.0
    %165 = vmatpush2.msra.mxu0 0.0
    %166 = vmatprep.subr.mxu0 0.0
    %167 = vmatpush2.msra.mxu0 0.0
    %168 = vmatprep.subr.mxu0 0.0
    %169 = vmatpush2.msra.mxu0 0.0
    %170 = vmatprep.subr.mxu0 0.0
    %171 = vmatpush2.msra.mxu0 0.0
    %172 = vmatprep.subr.mxu0 0.0
    %173 = vmatpush2.msra.mxu0 0.0
    %174 = vmatprep.subr.mxu0 0.0
    %175 = vmatpush2.msra.mxu0 0.0
    %176 = vmatprep.subr.mxu0 0.0
    %177 = vmatpush2.msra.mxu0 0.0
    %178 = vmatprep.mubr.f32.mxu0 0.0
    %179 = vmatmul.mubr.f32.gmra.mxu0 %v112
    %v180 = vpop.f32.mrf.mxu0
    %v181 = vadd.f32 %v108, %v180
    %v182 = vpop.f32.mrf.mxu0
    %183 = vdwg.mxu0
    %184 = vst [vmem:[#allocation2] sm:$0xff] %v181
    // Predicated region
    $region18: #{tpu_custom_call.1} parent=1 // pred_check
      _
    $region19: #{tpu_custom_call.1} parent=1 // pred_check_branch
      %186 = sbr.rel (0) target = $region21
    $region20: #{tpu_custom_call.1} parent=1 // pred_region
      %s188 = ssub.s32 128, 128
      %189 = vsyncadd [#allocation3], %s188
      %s191 = sshll.u32 [#allocation2], 4
      %s192 = int_to_ptr.vmem [resolvable:$true] %s191
      %194 = dma.vmem_to_hbm [thread:$0]  %s192, 128, %s4, [#allocation3]
    $region21: #{tpu_custom_call.1} parent=1 // pred_fallthru
      _
    // Predicated region
    $region22: #{tpu_custom_call.1} parent=1 // pred_check
      _
    $region23: #{tpu_custom_call.1} parent=1 // pred_check_branch
      %196 = sbr.rel (0) target = $region25
    $region24: #{tpu_custom_call.1} parent=1 // pred_region
      %197 = dma.done [#allocation3], 128
    $region25: #{tpu_custom_call.1} parent=1 // pred_fallthru
      _
    %198 = vsyncpa [#allocation3], 1

</llo_original>
